<compile_context>
chip_gen: v6e
topology: v6e:2x2x1
jax: 0.10.0
libtpu: 0.0.40
codegen_flags: <defaults>
</compile_context>

<pallas_src>
import jax
import jax.numpy as jnp
from jax.experimental import pallas as pl
from jax.experimental.pallas import tpu as pltpu

EPS = 1e-5


def _vmem_limit_bytes():
    """Scoped VMEM limit: half the physical capacity (64 MiB on 128-MiB
    v5e/v6e, 32 MiB on 64-MiB v7x); conservative 32 MiB if the query fails."""
    try:
        phys = int(pltpu.get_tpu_info().vmem_capacity_bytes)
    except Exception:
        phys = 64 << 20
    return max(32 << 20, min(phys // 2, 96 << 20))


def _pick_tiles(n, c, l, *, budget):
    """Choose (nt, lt) for a (nt, C, lt) f32 block.

    - lt is the full lane extent L, or a multiple of 256 (lane aligned and
      even, so re/im lane parity is preserved per block); prefers an exact
      divisor of L so no edge masking is needed.
    - nt always divides N (no row masking) and is capped at ceil(N/2) so the
      row-tile grid axis has extent >= 2 (both v7x TensorCores get work).
    - Budget math is sublane-padding aware: a (nt, C, lt) f32 block really
      occupies nt * ceil(C/8)*8 * lt * 4 bytes of VMEM.
    """
    c_pad = -(-c // 8) * 8
    lane_bytes = c_pad * 4
    if l * lane_bytes <= budget:
        lt = l
    else:
        cap = max(256, (budget // lane_bytes) // 256 * 256)
        lt = cap
        d = cap
        while d >= 256:                      # prefer a tile that divides L
            if l % d == 0:
                lt = d
                break
            d -= 256
        if lt >= l:
            lt = l
    # TODO(synk): if C alone exceeds the budget (c_pad * 256 * 4 > budget) the
    # channel dim would need its own grid axis; not needed for realistic C.
    nt_cap = max(1, budget // (lane_bytes * lt))
    if n > 1:
        nt_cap = min(nt_cap, -(-n // 2))     # >= 2 row tiles for 2-TC v7x
    nt = 1
    for d in range(min(n, nt_cap), 0, -1):   # largest divisor of N
        if n % d == 0:
            nt = d
            break
    return nt, lt


def _complex_to_interleaved(x):
    """(N, C, H, W) complex64 -> (N, C, 2*H*W) f32, lanes [re, im, re, im, ...]."""
    n, c, h, w = x.shape
    try:                                     # free bitcast view when supported
        v = jax.lax.bitcast_convert_type(x, jnp.float32)        # (N,C,H,W,2)
    except Exception:                        # fallback: one fused 8B-in/8B-out pass
        v = jnp.stack([jnp.real(x), jnp.imag(x)], axis=-1)
    return v.astype(jnp.float32).reshape(n, c, 2 * h * w)


def _interleaved_to_complex(y, n, c, h, w):
    """(N, C, 2*H*W) f32 -> (N, C, H, W) complex64."""
    v = y.reshape(n, c, h, w, 2)
    try:                                     # free bitcast view when supported
        return jax.lax.bitcast_convert_type(v, jnp.complex64)   # (N,C,H,W)
    except Exception:
        return jax.lax.complex(v[..., 0], v[..., 1])


def _fold(psum, psumsq, weight, bias, count, c, eps):
    """Fold per-channel stats + affine into (scale, shift), each (1, C, 1)."""
    s = jnp.sum(psum, axis=0)[:, 0]          # (C,)
    ss = jnp.sum(psumsq, axis=0)[:, 0]       # (C,)
    mean = s / count
    # TODO(synk): E[x^2]-E[x]^2 can lose precision for strongly off-centered
    # data; mean-shifted / compensated accumulation would fix it if needed.
    var = jnp.maximum(ss / count - mean * mean, 0.0)   # biased variance
    inv = jax.lax.rsqrt(var + eps)
    g = (jnp.ones((c,), jnp.float32) if weight is None
         else weight.astype(jnp.float32))
    b = (jnp.zeros((c,), jnp.float32) if bias is None
         else bias.astype(jnp.float32))
    scale = g * inv
    shift = b - mean * scale
    return scale.reshape(1, c, 1), shift.reshape(1, c, 1)


def c_batch_norm2d(x, weight_re=None, bias_re=None, weight_im=None,
                   bias_im=None, *, eps=EPS):
    """Training-mode forward of cBatchNorm2d for a complex (N, C, H, W) input."""
    # TODO(synk): running_mean/running_var tracking (track_running_stats,
    # momentum) and the eval-mode path are stateful buffers with no effect on
    # the training-mode forward output; they are not implemented here.
    n, c, h, w = x.shape
    hw = h * w
    l = 2 * hw                               # interleaved lane extent
    count = float(n * hw)                    # per-channel count for each plane

    xi = _complex_to_interleaved(x.astype(jnp.complex64))      # (N, C, 2*HW)

    vmem_limit = _vmem_limit_bytes()

    # ----------------- pass 1: per-channel partial sums -----------------
    # 1 big input x 2 pipeline buffers -> allow up to vmem_limit/4 per block.
    nt1, lt1 = _pick_tiles(n, c, l, budget=vmem_limit // 4)
    nn1, nl1 = pl.cdiv(n, nt1), pl.cdiv(l, lt1)
    lane_mask = (l % lt1) != 0               # row tiles always divide N

    def stats_kernel(x_ref, sr_ref, ssr_ref, si_ref, ssi_ref):
        @pl.when(pl.program_id(1) == 0)
        def _init():
            sr_ref[...] = jnp.zeros_like(sr_ref)
            ssr_ref[...] = jnp.zeros_like(ssr_ref)
            si_ref[...] = jnp.zeros_like(si_ref)
            ssi_ref[...] = jnp.zeros_like(ssi_ref)

        lane = jax.lax.broadcasted_iota(jnp.int32, (1, 1, lt1), 2)
        is_re = (lane & 1) == 0              # even lanes = real, odd = imag

        def accumulate(blk):
            xr = jnp.where(is_re, blk, 0.0)  # real plane, zeros elsewhere
            xim = blk - xr                   # imag plane, zeros elsewhere

            def red(v):                      # lane reduce then row reduce
                return jnp.sum(jnp.sum(v, axis=2, keepdims=True),
                               axis=0, keepdims=True)

            sr_ref[...] += red(xr)
            ssr_ref[...] += red(xr * xr)
            si_ref[...] += red(xim)
            ssi_ref[...] += red(xim * xim)

        if lane_mask:                        # edge-only masking (last lane block)
            edge = nl1 - 1

            @pl.when(pl.program_id(1) != edge)
            def _interior():
                accumulate(x_ref[...])

            @pl.when(pl.program_id(1) == edge)
            def _edge():
                ok = (pl.program_id(1) * lt1 + lane) < l
                accumulate(jnp.where(ok, x_ref[...], 0.0))
        else:
            accumulate(x_ref[...])

    big1 = pl.BlockSpec((nt1, c, lt1), lambda i, j: (i, 0, j))
    stat = pl.BlockSpec((1, c, 1), lambda i, j: (i, 0, 0))
    stat_shape = jax.ShapeDtypeStruct((nn1, c, 1), jnp.float32)
    sum_re, sumsq_re, sum_im, sumsq_im = pl.pallas_call(
        stats_kernel,
        out_shape=(stat_shape, stat_shape, stat_shape, stat_shape),
        grid=(nn1, nl1),
        in_specs=[big1],
        out_specs=(stat, stat, stat, stat),
        compiler_params=pltpu.CompilerParams(
            dimension_semantics=("parallel", "arbitrary"),
            vmem_limit_bytes=vmem_limit),
    )(xi)

    # ------- tiny O(C) math: fold mean/var/eps/affine into scale & shift -------
    scale_re, shift_re = _fold(sum_re, sumsq_re, weight_re, bias_re, count, c, eps)
    scale_im, shift_im = _fold(sum_im, sumsq_im, weight_im, bias_im, count, c, eps)

    # ----------------- pass 2: interleaved elementwise normalize -----------------
    # 1 big input + 1 big output, double buffered -> vmem_limit/8 per block.
    nt2, lt2 = _pick_tiles(n, c, l, budget=vmem_limit // 8)
    nn2, nl2 = pl.cdiv(n, nt2), pl.cdiv(l, lt2)

    def norm_kernel(x_ref, scr_ref, shr_ref, sci_ref, shi_ref, o_ref):
        lane = jax.lax.broadcasted_iota(jnp.int32, (1, 1, lt2), 2)
        is_re = (lane & 1) == 0
        scale = jnp.where(is_re, scr_ref[...], sci_ref[...])   # (1, C, lt2)
        shift = jnp.where(is_re, shr_ref[...], shi_ref[...])
        o_ref[...] = x_ref[...] * scale + shift

    big2 = pl.BlockSpec((nt2, c, lt2), lambda i, j: (i, 0, j))
    param = pl.BlockSpec((1, c, 1), lambda i, j: (0, 0, 0))
    y = pl.pallas_call(
        norm_kernel,
        out_shape=jax.ShapeDtypeStruct((n, c, l), jnp.float32),
        grid=(nn2, nl2),
        in_specs=[big2, param, param, param, param],
        out_specs=big2,
        compiler_params=pltpu.CompilerParams(
            dimension_semantics=("parallel", "parallel"),
            vmem_limit_bytes=vmem_limit),
    )(xi, scale_re, shift_re, scale_im, shift_im)

    # TODO(synk): optional small-activation fast path fusing pass 1 + pass 2 in
    # one pallas_call (single HBM read) when the whole array fits in VMEM.
    return _interleaved_to_complex(y, n, c, h, w)


def c_batch_norm2d_ref(x, eps=EPS):
    """Pure-JAX reference matching torch training-mode semantics (weight=1, bias=0)."""
    def _bn(v):
        mean = jnp.mean(v, axis=(0, 2, 3), keepdims=True)
        var = jnp.mean((v - mean) ** 2, axis=(0, 2, 3), keepdims=True)
        return (v - mean) / jnp.sqrt(var + eps)

    return jax.lax.complex(_bn(jnp.real(x)), _bn(jnp.imag(x)))


if __name__ == "__main__":
    key = jax.random.PRNGKey(0)
    k_re, k_im = jax.random.split(key)

    batch, channels, height, width = 2, 4, 16, 16
    re_in = jax.random.normal(k_re, (batch, channels, height, width), jnp.float32)
    im_in = jax.random.normal(k_im, (batch, channels, height, width), jnp.float32)
    x = jax.lax.complex(re_in, im_in)  # complex64

    # Default-initialized BatchNorm2d affine params: weight=1, bias=0.
    weight = jnp.ones((channels,), jnp.float32)
    bias = jnp.zeros((channels,), jnp.float32)

    out = c_batch_norm2d(x, weight, bias, weight, bias)
    out = jax.block_until_ready(out)

    ref = c_batch_norm2d_ref(x)
    assert out.shape == x.shape and out.dtype == jnp.complex64
    assert jnp.allclose(jnp.real(out), jnp.real(ref), atol=1e-4, rtol=1e-4)
    assert jnp.allclose(jnp.imag(out), jnp.imag(ref), atol=1e-4, rtol=1e-4)

    print("KERNEL_OK")
</pallas_src>

<mosaic_0001>
module attributes {stable_mosaic.version = 11 : i64} {
  func.func @stats_kernel(%arg0: i32, %arg1: i32, %arg2: memref<1x4x512xf32, #tpu.memory_space<vmem>>, %arg3: memref<1x4x1xf32, #tpu.memory_space<vmem>>, %arg4: memref<1x4x1xf32, #tpu.memory_space<vmem>>, %arg5: memref<1x4x1xf32, #tpu.memory_space<vmem>>, %arg6: memref<1x4x1xf32, #tpu.memory_space<vmem>>) attributes {dimension_semantics = [#tpu.dimension_semantics<parallel>, #tpu.dimension_semantics<arbitrary>], iteration_bounds = array<i64: 2, 1>, scalar_prefetch = 0 : i64, scratch_operands = 0 : i64, tpu.core_type = #tpu.core_type<tc>, window_params = [{transform_indices = @transform_0, window_bounds = array<i64: 1, 4, 512>}, {transform_indices = @transform_1, window_bounds = array<i64: 1, 4, 1>}, {transform_indices = @transform_2, window_bounds = array<i64: 1, 4, 1>}, {transform_indices = @transform_3, window_bounds = array<i64: 1, 4, 1>}, {transform_indices = @transform_4, window_bounds = array<i64: 1, 4, 1>}]} {
    %c0_i32 = arith.constant 0 : i32
    %0 = arith.cmpi eq, %arg1, %c0_i32 : i32
    %1 = arith.extui %0 : i1 to i32
    %c0_i32_0 = arith.constant 0 : i32
    %2 = arith.cmpi ne, %1, %c0_i32_0 : i32
    scf.if %2 {
      %cst_36 = arith.constant 0.000000e+00 : f32
      %44 = vector.broadcast %cst_36 : f32 to vector<1x4x1xf32>
      %c0_37 = arith.constant 0 : index
      %c0_38 = arith.constant 0 : index
      %c0_39 = arith.constant 0 : index
      %45 = vector.load %arg3[%c0_37, %c0_38, %c0_39] : memref<1x4x1xf32, #tpu.memory_space<vmem>>, vector<1x4x1xf32>
      tpu.vector_store %arg3[%c0_37, %c0_38, %c0_39], %44 {strides = array<i32>} : memref<1x4x1xf32, #tpu.memory_space<vmem>>, vector<1x4x1xf32>,
      %cst_40 = arith.constant 0.000000e+00 : f32
      %46 = vector.broadcast %cst_40 : f32 to vector<1x4x1xf32>
      %c0_41 = arith.constant 0 : index
      %c0_42 = arith.constant 0 : index
      %c0_43 = arith.constant 0 : index
      %47 = vector.load %arg4[%c0_41, %c0_42, %c0_43] : memref<1x4x1xf32, #tpu.memory_space<vmem>>, vector<1x4x1xf32>
      tpu.vector_store %arg4[%c0_41, %c0_42, %c0_43], %46 {strides = array<i32>} : memref<1x4x1xf32, #tpu.memory_space<vmem>>, vector<1x4x1xf32>,
      %cst_44 = arith.constant 0.000000e+00 : f32
      %48 = vector.broadcast %cst_44 : f32 to vector<1x4x1xf32>
      %c0_45 = arith.constant 0 : index
      %c0_46 = arith.constant 0 : index
      %c0_47 = arith.constant 0 : index
      %49 = vector.load %arg5[%c0_45, %c0_46, %c0_47] : memref<1x4x1xf32, #tpu.memory_space<vmem>>, vector<1x4x1xf32>
      tpu.vector_store %arg5[%c0_45, %c0_46, %c0_47], %48 {strides = array<i32>} : memref<1x4x1xf32, #tpu.memory_space<vmem>>, vector<1x4x1xf32>,
      %cst_48 = arith.constant 0.000000e+00 : f32
      %50 = vector.broadcast %cst_48 : f32 to vector<1x4x1xf32>
      %c0_49 = arith.constant 0 : index
      %c0_50 = arith.constant 0 : index
      %c0_51 = arith.constant 0 : index
      %51 = vector.load %arg6[%c0_49, %c0_50, %c0_51] : memref<1x4x1xf32, #tpu.memory_space<vmem>>, vector<1x4x1xf32>
      tpu.vector_store %arg6[%c0_49, %c0_50, %c0_51], %50 {strides = array<i32>} : memref<1x4x1xf32, #tpu.memory_space<vmem>>, vector<1x4x1xf32>,
    } else {
    }
    %3 = tpu.iota {dimensions = array<i32: 2>} : vector<1x1x512xi32>
    %c1_i32 = arith.constant 1 : i32
    %4 = vector.broadcast %c1_i32 : i32 to vector<1x1x512xi32>
    %5 = arith.andi %3, %4 : vector<1x1x512xi32>
    %c0_i32_1 = arith.constant 0 : i32
    %6 = vector.broadcast %c0_i32_1 : i32 to vector<1x1x512xi32>
    %7 = arith.cmpi eq, %5, %6 : vector<1x1x512xi32>
    %c0 = arith.constant 0 : index
    %c0_2 = arith.constant 0 : index
    %c0_3 = arith.constant 0 : index
    %8 = vector.load %arg2[%c0, %c0_2, %c0_3] : memref<1x4x512xf32, #tpu.memory_space<vmem>>, vector<1x4x512xf32>
    %cst = arith.constant 0.000000e+00 : f32
    %9 = vector.shape_cast %7 : vector<1x1x512xi1> to vector<1x1x512xi1>
    %10 = vector.broadcast %9 : vector<1x1x512xi1> to vector<1x4x512xi1>
    %11 = vector.broadcast %cst : f32 to vector<1x4x512xf32>
    %12 = arith.select %10, %8, %11 : vector<1x4x512xi1>, vector<1x4x512xf32>
    %13 = arith.subf %8, %12 : vector<1x4x512xf32>
    %c0_4 = arith.constant 0 : index
    %c0_5 = arith.constant 0 : index
    %c0_6 = arith.constant 0 : index
    %14 = vector.load %arg3[%c0_4, %c0_5, %c0_6] : memref<1x4x1xf32, #tpu.memory_space<vmem>>, vector<1x4x1xf32>
    %cst_7 = arith.constant dense<0.000000e+00> : vector<1x4xf32>
    %15 = vector.multi_reduction <add>, %12, %cst_7 [2] : vector<1x4x512xf32> to vector<1x4xf32>
    %16 = vector.shape_cast %15 : vector<1x4xf32> to vector<1x4x1xf32>
    %cst_8 = arith.constant dense<0.000000e+00> : vector<4x1xf32>
    %17 = vector.multi_reduction <add>, %16, %cst_8 [0] : vector<1x4x1xf32> to vector<4x1xf32>
    %18 = vector.shape_cast %17 : vector<4x1xf32> to vector<1x4x1xf32>
    %19 = arith.addf %14, %18 : vector<1x4x1xf32>
    %c0_9 = arith.constant 0 : index
    %c0_10 = arith.constant 0 : index
    %c0_11 = arith.constant 0 : index
    %20 = vector.load %arg3[%c0_9, %c0_10, %c0_11] : memref<1x4x1xf32, #tpu.memory_space<vmem>>, vector<1x4x1xf32>
    tpu.vector_store %arg3[%c0_9, %c0_10, %c0_11], %19 {strides = array<i32>} : memref<1x4x1xf32, #tpu.memory_space<vmem>>, vector<1x4x1xf32>,
    %c0_12 = arith.constant 0 : index
    %c0_13 = arith.constant 0 : index
    %c0_14 = arith.constant 0 : index
    %21 = vector.load %arg4[%c0_12, %c0_13, %c0_14] : memref<1x4x1xf32, #tpu.memory_space<vmem>>, vector<1x4x1xf32>
    %22 = arith.mulf %12, %12 : vector<1x4x512xf32>
    %cst_15 = arith.constant dense<0.000000e+00> : vector<1x4xf32>
    %23 = vector.multi_reduction <add>, %22, %cst_15 [2] : vector<1x4x512xf32> to vector<1x4xf32>
    %24 = vector.shape_cast %23 : vector<1x4xf32> to vector<1x4x1xf32>
    %cst_16 = arith.constant dense<0.000000e+00> : vector<4x1xf32>
    %25 = vector.multi_reduction <add>, %24, %cst_16 [0] : vector<1x4x1xf32> to vector<4x1xf32>
    %26 = vector.shape_cast %25 : vector<4x1xf32> to vector<1x4x1xf32>
    %27 = arith.addf %21, %26 : vector<1x4x1xf32>
    %c0_17 = arith.constant 0 : index
    %c0_18 = arith.constant 0 : index
    %c0_19 = arith.constant 0 : index
    %28 = vector.load %arg4[%c0_17, %c0_18, %c0_19] : memref<1x4x1xf32, #tpu.memory_space<vmem>>, vector<1x4x1xf32>
    tpu.vector_store %arg4[%c0_17, %c0_18, %c0_19], %27 {strides = array<i32>} : memref<1x4x1xf32, #tpu.memory_space<vmem>>, vector<1x4x1xf32>,
    %c0_20 = arith.constant 0 : index
    %c0_21 = arith.constant 0 : index
    %c0_22 = arith.constant 0 : index
    %29 = vector.load %arg5[%c0_20, %c0_21, %c0_22] : memref<1x4x1xf32, #tpu.memory_space<vmem>>, vector<1x4x1xf32>
    %cst_23 = arith.constant dense<0.000000e+00> : vector<1x4xf32>
    %30 = vector.multi_reduction <add>, %13, %cst_23 [2] : vector<1x4x512xf32> to vector<1x4xf32>
    %31 = vector.shape_cast %30 : vector<1x4xf32> to vector<1x4x1xf32>
    %cst_24 = arith.constant dense<0.000000e+00> : vector<4x1xf32>
    %32 = vector.multi_reduction <add>, %31, %cst_24 [0] : vector<1x4x1xf32> to vector<4x1xf32>
    %33 = vector.shape_cast %32 : vector<4x1xf32> to vector<1x4x1xf32>
    %34 = arith.addf %29, %33 : vector<1x4x1xf32>
    %c0_25 = arith.constant 0 : index
    %c0_26 = arith.constant 0 : index
    %c0_27 = arith.constant 0 : index
    %35 = vector.load %arg5[%c0_25, %c0_26, %c0_27] : memref<1x4x1xf32, #tpu.memory_space<vmem>>, vector<1x4x1xf32>
    tpu.vector_store %arg5[%c0_25, %c0_26, %c0_27], %34 {strides = array<i32>} : memref<1x4x1xf32, #tpu.memory_space<vmem>>, vector<1x4x1xf32>,
    %c0_28 = arith.constant 0 : index
    %c0_29 = arith.constant 0 : index
    %c0_30 = arith.constant 0 : index
    %36 = vector.load %arg6[%c0_28, %c0_29, %c0_30] : memref<1x4x1xf32, #tpu.memory_space<vmem>>, vector<1x4x1xf32>
    %37 = arith.mulf %13, %13 : vector<1x4x512xf32>
    %cst_31 = arith.constant dense<0.000000e+00> : vector<1x4xf32>
    %38 = vector.multi_reduction <add>, %37, %cst_31 [2] : vector<1x4x512xf32> to vector<1x4xf32>
    %39 = vector.shape_cast %38 : vector<1x4xf32> to vector<1x4x1xf32>
    %cst_32 = arith.constant dense<0.000000e+00> : vector<4x1xf32>
    %40 = vector.multi_reduction <add>, %39, %cst_32 [0] : vector<1x4x1xf32> to vector<4x1xf32>
    %41 = vector.shape_cast %40 : vector<4x1xf32> to vector<1x4x1xf32>
    %42 = arith.addf %36, %41 : vector<1x4x1xf32>
    %c0_33 = arith.constant 0 : index
    %c0_34 = arith.constant 0 : index
    %c0_35 = arith.constant 0 : index
    %43 = vector.load %arg6[%c0_33, %c0_34, %c0_35] : memref<1x4x1xf32, #tpu.memory_space<vmem>>, vector<1x4x1xf32>
    tpu.vector_store %arg6[%c0_33, %c0_34, %c0_35], %42 {strides = array<i32>} : memref<1x4x1xf32, #tpu.memory_space<vmem>>, vector<1x4x1xf32>,
    return
  }
  func.func @transform_0(%arg0: i32, %arg1: i32) -> (i32, i32, i32) {
    %c0_i32 = arith.constant 0 : i32
    %c0_i32_0 = arith.constant 0 : i32
    return %arg0, %c0_i32, %arg1 : i32, i32, i32
  }
  func.func @transform_1(%arg0: i32, %arg1: i32) -> (i32, i32, i32) {
    %c0_i32 = arith.constant 0 : i32
    %c0_i32_0 = arith.constant 0 : i32
    %c0_i32_1 = arith.constant 0 : i32
    return %arg0, %c0_i32, %c0_i32_0 : i32, i32, i32
  }
  func.func @transform_2(%arg0: i32, %arg1: i32) -> (i32, i32, i32) {
    %c0_i32 = arith.constant 0 : i32
    %c0_i32_0 = arith.constant 0 : i32
    %c0_i32_1 = arith.constant 0 : i32
    return %arg0, %c0_i32, %c0_i32_0 : i32, i32, i32
  }
  func.func @transform_3(%arg0: i32, %arg1: i32) -> (i32, i32, i32) {
    %c0_i32 = arith.constant 0 : i32
    %c0_i32_0 = arith.constant 0 : i32
    %c0_i32_1 = arith.constant 0 : i32
    return %arg0, %c0_i32, %c0_i32_0 : i32, i32, i32
  }
  func.func @transform_4(%arg0: i32, %arg1: i32) -> (i32, i32, i32) {
    %c0_i32 = arith.constant 0 : i32
    %c0_i32_0 = arith.constant 0 : i32
    %c0_i32_1 = arith.constant 0 : i32
    return %arg0, %c0_i32, %c0_i32_0 : i32, i32, i32
  }
}

</mosaic_0001>

<llo_original>
// kernel: tpu_custom_call.1
$region0: #{tpu_custom_call.1}
  #allocation0 [shape = 'u32[]', space=smem, size = 0x4, offset = 0x4, fixed_abs, tag = 'smem constant byte address 0x4 - core index']
  #allocation1 [shape = 'u32[144,128]{1,0:T(1,128)}', space=vmem, size = 0x12000, scoped, tag = 'internal scratch']
  %s0 = inlined_call_operand.hbm [shape: f32[2,4,512], index: 0, kind: input, shape index: {}]
  %s1 = inlined_call_operand.vmem [shape: f32[2,4,1], index: 1, kind: output, shape index: {0}]
  %s2 = inlined_call_operand.vmem [shape: f32[2,4,1], index: 2, kind: output, shape index: {1}]
  %s3 = inlined_call_operand.vmem [shape: f32[2,4,1], index: 3, kind: output, shape index: {2}]
  %s4 = inlined_call_operand.vmem [shape: f32[2,4,1], index: 4, kind: output, shape index: {3}]
  %5 = xla_tuple %s1, %s2, %s3, %s4
  %s6 = sld [smem:[#allocation0]]
  $region69: #{tpu_custom_call.1} parent=0
    _
  %s8 = ssub.s32 1, %s6
  %s9 = scalar_select 0, %s8, %s6
  $region1: #{tpu_custom_call.1} parent=0
    #allocation2 [shape = 'u8[16384]{0}', space=vmem, size = 0x4000, scoped, tag = 'input window, operand 0']
    #allocation3 [shape = 's32[2]{0}', space=sflag, size = 0x8, scoped, tag = 'scoped memory for tpu_custom_call.1']
    %10 = vsyncpa [#allocation3], 0
    %s11 = scalar_lea.sflag [#allocation3], 1
    %12 = vsyncpa %s11, 0
    loop: start=0, step=1, limit=4
    $region2: #{tpu_custom_call.1} parent=1 // loop_pre_header
      _
    $region3: #{tpu_custom_call.1} parent=1 // loop_header
      %s14 = sphi 0, %s18
      %p15 = scmp.ge.s32.totalorder %s14, 4
      %s21 = sphi 0, %s33
      %s22 = sphi 0, %s29
      %s23 = sphi 0, %s21
      %s24 = sphi 0, %s22
      %s25 = sphi 0, %s23
      %s26 = sphi 0, %s24
      %s38 = sphi 0, %s40
      %s41 = sphi 0, %s38
      %s42 = sphi 0, %s41
      %s58 = sphi 0, %s42
      %s64 = sphi 0, %s66
      %s67 = sphi 0, %s64
      %s68 = sphi 0, %s67
      %s84 = sphi 0, %s68
      %s90 = sphi 0, %s92
      %s93 = sphi 0, %s90
      %s94 = sphi 0, %s93
      %s110 = sphi 0, %s94
      %s116 = sphi 0, %s118
      %s119 = sphi 0, %s116
      %s120 = sphi 0, %s119
      %s136 = sphi 0, %s120
      %s142 = sphi 0, %s144
      %s145 = sphi 0, %s142
      %s146 = sphi 0, %s145
      %s162 = sphi 0, %s146
    $region4: #{tpu_custom_call.1} parent=1 // loop_header_branch
      %17 = sbr.rel (%p15) target = $region8
    $region5: #{tpu_custom_call.1} parent=1 // loop_body
      %s19 = ssub.s32 %s14, 1
      %s20 = ssub.s32 %s14, 2
      %s27 = sadd.s32 1, %s22
      %p28 = scmp.ge.s32.totalorder %s27, 1
      %s29 = scalar_select %p28, 0, %s27
      %s30 = sadd.s32 1, %s21
      %s31 = scalar_select %p28, %s30, %s21
      %p32 = scmp.ge.s32.totalorder %s31, 2
      %s33 = scalar_select %p32, 0, %s31
      %s34 = ssub.s32 %s21, %s33
      %s35 = ssub.s32 %s22, %s29
      %s36 = sor.u32 %s34, %s35
      %p37 = scmp.eq.s32.totalorder %s36, 0
      %s39 = sadd.s32 %s38, 1
      %s40 = scalar_select %p37, %s38, %s39
      %p43 = pneg %p37
      %p44 = scmp.eq.s32.totalorder %s14, 1
      %p45 = por %p43, %p44
      %p46 = scmp.ne.s32.totalorder %s38, %s41
      %p47 = scmp.eq.s32.totalorder %s14, 0
      %p48 = por %p46, %p47
      %p49 = scmp.ne.s32.totalorder %s38, %s41
      %p50 = scmp.eq.s32.totalorder %s19, 1
      %p51 = por %p49, %p50
      %p52 = scmp.ne.s32.totalorder %s41, %s42
      %p53 = scmp.eq.s32.totalorder %s19, 0
      %p54 = por %p52, %p53
      %p55 = scmp.ne.s32.totalorder %s41, %s42
      %p56 = scmp.eq.s32.totalorder %s20, 1
      %p57 = por %p55, %p56
      %p59 = scmp.ne.s32.totalorder %s42, %s58
      %p60 = scmp.eq.s32.totalorder %s20, 0
      %p61 = por %p59, %p60
      %s62 = ssub.s32 %s21, %s33
      %p63 = scmp.eq.s32.totalorder %s62, 0
      %s65 = sadd.s32 %s64, 1
      %s66 = scalar_select %p63, %s64, %s65
      %p69 = pneg %p63
      %p70 = scmp.eq.s32.totalorder %s14, 1
      %p71 = por %p69, %p70
      %p72 = scmp.ne.s32.totalorder %s64, %s67
      %p73 = scmp.eq.s32.totalorder %s14, 0
      %p74 = por %p72, %p73
      %p75 = scmp.ne.s32.totalorder %s64, %s67
      %p76 = scmp.eq.s32.totalorder %s19, 1
      %p77 = por %p75, %p76
      %p78 = scmp.ne.s32.totalorder %s67, %s68
      %p79 = scmp.eq.s32.totalorder %s19, 0
      %p80 = por %p78, %p79
      %p81 = scmp.ne.s32.totalorder %s67, %s68
      %p82 = scmp.eq.s32.totalorder %s20, 1
      %p83 = por %p81, %p82
      %p85 = scmp.ne.s32.totalorder %s68, %s84
      %p86 = scmp.eq.s32.totalorder %s20, 0
      %p87 = por %p85, %p86
      %s88 = ssub.s32 %s21, %s33
      %p89 = scmp.eq.s32.totalorder %s88, 0
      %s91 = sadd.s32 %s90, 1
      %s92 = scalar_select %p89, %s90, %s91
      %p95 = pneg %p89
      %p96 = scmp.eq.s32.totalorder %s14, 1
      %p97 = por %p95, %p96
      %p98 = scmp.ne.s32.totalorder %s90, %s93
      %p99 = scmp.eq.s32.totalorder %s14, 0
      %p100 = por %p98, %p99
      %p101 = scmp.ne.s32.totalorder %s90, %s93
      %p102 = scmp.eq.s32.totalorder %s19, 1
      %p103 = por %p101, %p102
      %p104 = scmp.ne.s32.totalorder %s93, %s94
      %p105 = scmp.eq.s32.totalorder %s19, 0
      %p106 = por %p104, %p105
      %p107 = scmp.ne.s32.totalorder %s93, %s94
      %p108 = scmp.eq.s32.totalorder %s20, 1
      %p109 = por %p107, %p108
      %p111 = scmp.ne.s32.totalorder %s94, %s110
      %p112 = scmp.eq.s32.totalorder %s20, 0
      %p113 = por %p111, %p112
      %s114 = ssub.s32 %s21, %s33
      %p115 = scmp.eq.s32.totalorder %s114, 0
      %s117 = sadd.s32 %s116, 1
      %s118 = scalar_select %p115, %s116, %s117
      %p121 = pneg %p115
      %p122 = scmp.eq.s32.totalorder %s14, 1
      %p123 = por %p121, %p122
      %p124 = scmp.ne.s32.totalorder %s116, %s119
      %p125 = scmp.eq.s32.totalorder %s14, 0
      %p126 = por %p124, %p125
      %p127 = scmp.ne.s32.totalorder %s116, %s119
      %p128 = scmp.eq.s32.totalorder %s19, 1
      %p129 = por %p127, %p128
      %p130 = scmp.ne.s32.totalorder %s119, %s120
      %p131 = scmp.eq.s32.totalorder %s19, 0
      %p132 = por %p130, %p131
      %p133 = scmp.ne.s32.totalorder %s119, %s120
      %p134 = scmp.eq.s32.totalorder %s20, 1
      %p135 = por %p133, %p134
      %p137 = scmp.ne.s32.totalorder %s120, %s136
      %p138 = scmp.eq.s32.totalorder %s20, 0
      %p139 = por %p137, %p138
      %s140 = ssub.s32 %s21, %s33
      %p141 = scmp.eq.s32.totalorder %s140, 0
      %s143 = sadd.s32 %s142, 1
      %s144 = scalar_select %p141, %s142, %s143
      %p147 = pneg %p141
      %p148 = scmp.eq.s32.totalorder %s14, 1
      %p149 = por %p147, %p148
      %p150 = scmp.ne.s32.totalorder %s142, %s145
      %p151 = scmp.eq.s32.totalorder %s14, 0
      %p152 = por %p150, %p151
      %p153 = scmp.ne.s32.totalorder %s142, %s145
      %p154 = scmp.eq.s32.totalorder %s19, 1
      %p155 = por %p153, %p154
      %p156 = scmp.ne.s32.totalorder %s145, %s146
      %p157 = scmp.eq.s32.totalorder %s19, 0
      %p158 = por %p156, %p157
      %p159 = scmp.ne.s32.totalorder %s145, %s146
      %p160 = scmp.eq.s32.totalorder %s20, 1
      %p161 = por %p159, %p160
      %p163 = scmp.ne.s32.totalorder %s146, %s162
      %p164 = scmp.eq.s32.totalorder %s20, 0
      %p165 = por %p163, %p164
      %p166 = scmp.le.s32.totalorder 1, %s14
      %p167 = scmp.lt.s32.totalorder %s14, 3
      %p168 = pnand %p166, %p167
      %p169 = pneg %p168
      // Predicated region
      $region9: #{tpu_custom_call.1} parent=5 // pred_check
        _
      $region10: #{tpu_custom_call.1} parent=5 // pred_check_branch
        %171 = sbr.rel (%p168) target = $region12
      $region11: #{tpu_custom_call.1} parent=5 // pred_region
        %s172 = ssub.s32 %s14, 1
      $region12: #{tpu_custom_call.1} parent=5 // pred_fallthru
        _
      %p173 = scmp.lt.s32.totalorder %s14, 2
      // Predicated region
      $region13: #{tpu_custom_call.1} parent=5 // pred_check
        %p174 = pneg %p173
      $region14: #{tpu_custom_call.1} parent=5 // pred_check_branch
        %176 = sbr.rel (%p174) target = $region16
      $region15: #{tpu_custom_call.1} parent=5 // pred_region
        // Predicated region
        $region17: #{tpu_custom_call.1} parent=15 // pred_check
          %p177 = pneg %p48
        $region18: #{tpu_custom_call.1} parent=15 // pred_check_branch
          %179 = sbr.rel (%p177) target = $region20
        $region19: #{tpu_custom_call.1} parent=15 // pred_region
          %s180 = sand.u32 %s38, 1
          %s181 = scalar_lea.sflag [#allocation3], %s180
          %s182 = sand.u32 %s38, 1
          %s183 = smul.addr %s182, 16
          %s184 = scalar_lea.vmem [#allocation2], %s183
          %s185 = smul.u32 4, %s22
          %s187 = ssub.s32 256, 256
          %188 = vsyncadd %s181, %s187
          %s189 = smul.addr %s21, 4
          %s190 = sadd.s32 %s185, %s189
          %s191 = smul.addr %s190, 64
          %s192 = scalar_lea.hbm %s0, %s191
          %s194 = sshll.u32 %s184, 4
          %s195 = int_to_ptr.vmem [resolvable:$true] %s194
          %197 = dma.hbm_to_vmem [thread:$0]  %s192, 256, %s195, %s181
        $region20: #{tpu_custom_call.1} parent=15 // pred_fallthru
          _
      $region16: #{tpu_custom_call.1} parent=5 // pred_fallthru
        _
      %p198 = scmp.le.s32.totalorder 1, %s14
      %p199 = scmp.lt.s32.totalorder %s14, 3
      %p200 = pnand %p198, %p199
      %p201 = pneg %p200
      // Predicated region
      $region21: #{tpu_custom_call.1} parent=5 // pred_check
        _
      $region22: #{tpu_custom_call.1} parent=5 // pred_check_branch
        %203 = sbr.rel (%p200) target = $region24
      $region23: #{tpu_custom_call.1} parent=5 // pred_region
        %s204 = ssub.s32 %s14, 1
        %s205 = sand.u32 %s41, 1
        %s206 = scalar_lea.sflag [#allocation3], %s205
        %s207 = sand.u32 %s41, 1
        %s208 = smul.addr %s207, 16
        %s209 = scalar_lea.vmem [#allocation2], %s208
        // Predicated region
        $region25: #{tpu_custom_call.1} parent=23 // pred_check
          %p210 = pneg %p54
        $region26: #{tpu_custom_call.1} parent=23 // pred_check_branch
          %212 = sbr.rel (%p210) target = $region28
        $region27: #{tpu_custom_call.1} parent=23 // pred_region
          %213 = dma.done %s206, 256
        $region28: #{tpu_custom_call.1} parent=23 // pred_fallthru
          _
        %s214 = sand.u32 %s41, 1
        %s215 = scalar_lea.sflag [#allocation3], %s214
        %s216 = sand.u32 %s41, 1
        %s217 = smul.addr %s216, 16
        %s218 = scalar_lea.vmem [#allocation2], %s217
        %p219 = pneg %p54
        %p220 = pneg %p51
        %p221 = pneg %p80
        %p222 = pneg %p77
        %p223 = scmp.lt.s32.totalorder %s23, 1
        %s224 = scalar_select %p223, %s23, 1
        %s225 = smul.addr %s224, 4
        %s226 = scalar_lea.vmem %s1, %s225
        %p227 = pneg %p106
        %p228 = pneg %p103
        %p229 = scmp.lt.s32.totalorder %s23, 1
        %s230 = scalar_select %p229, %s23, 1
        %s231 = smul.addr %s230, 4
        %s232 = scalar_lea.vmem %s2, %s231
        %p233 = pneg %p132
        %p234 = pneg %p129
        %p235 = scmp.lt.s32.totalorder %s23, 1
        %s236 = scalar_select %p235, %s23, 1
        %s237 = smul.addr %s236, 4
        %s238 = scalar_lea.vmem %s3, %s237
        %p239 = pneg %p158
        %p240 = pneg %p155
        %p241 = scmp.lt.s32.totalorder %s23, 1
        %s242 = scalar_select %p241, %s23, 1
        %s243 = smul.addr %s242, 4
        %s244 = scalar_lea.vmem %s4, %s243
        %s245 = smul.u32 4, %s24
        %p246 = scmp.lt.s32.totalorder %s23, 1
        %s247 = scalar_select %p246, %s23, 1
        %s248 = smul.addr %s247, 4
        %s249 = scalar_lea.vmem %s1, %s248
        %p250 = scmp.lt.s32.totalorder %s23, 1
        %s251 = scalar_select %p250, %s23, 1
        %s252 = smul.addr %s251, 4
        %s253 = scalar_lea.vmem %s2, %s252
        %p254 = scmp.lt.s32.totalorder %s23, 1
        %s255 = scalar_select %p254, %s23, 1
        %s256 = smul.addr %s255, 4
        %s257 = scalar_lea.vmem %s3, %s256
        %p258 = scmp.lt.s32.totalorder %s23, 1
        %s259 = scalar_select %p258, %s23, 1
        %s260 = smul.addr %s259, 4
        %s261 = scalar_lea.vmem %s4, %s260
        %p262 = scmp.eq.s32.totalorder %s24, 0
        // Predicated region
        $region29: #{tpu_custom_call.1} parent=23 // pred_check
          %p263 = pneg %p262
        $region30: #{tpu_custom_call.1} parent=23 // pred_check_branch
          %265 = sbr.rel (%p263) target = $region32
        $region31: #{tpu_custom_call.1} parent=23 // pred_region
          %vm266 = vcmask 3072
          %267 = vst.msk [vmem:[%s249] sm:$0xf] %vm266, 0.0
          %268 = vst.msk [vmem:[%s253] sm:$0xf] %vm266, 0.0
          %269 = vst.msk [vmem:[%s257] sm:$0xf] %vm266, 0.0
          %270 = vst.msk [vmem:[%s261] sm:$0xf] %vm266, 0.0
        $region32: #{tpu_custom_call.1} parent=23 // pred_fallthru
          _
        %v271 = vlaneseq
        %v272 = vand.u32 %v271, 127
        %v273 = vadd.s32 %v272, 128
        %v274 = vadd.s32 %v272, 256
        %v275 = vadd.s32 %v272, 384
        %v276 = vand.u32 %v272, 1
        %v277 = vand.u32 %v273, 1
        %v278 = vand.u32 %v274, 1
        %v279 = vand.u32 %v275, 1
        %vm280 = vcmp.eq.s32.totalorder %v276, 0
        %vm281 = vcmp.eq.s32.totalorder %v277, 0
        %vm282 = vcmp.eq.s32.totalorder %v278, 0
        %vm283 = vcmp.eq.s32.totalorder %v279, 0
        %v284 = vld [vmem:[%s209] sm:$0xff]
        %v285 = vld [vmem:[%s209 + $0x8] sm:$0xff]
        %v286 = vsel %vm280, 1, 0
        %v287 = vsel %vm281, 1, 0
        %v288 = vsel %vm282, 1, 0
        %v289 = vsel %vm283, 1, 0
        %vm290 = vcmp.eq.s32.totalorder %v286, 1
        %vm291 = vcmp.eq.s32.totalorder %v287, 1
        %vm292 = vcmp.eq.s32.totalorder %v288, 1
        %vm293 = vcmp.eq.s32.totalorder %v289, 1
        %v296 = vcombine.high %v284, %v284
        %v297 = vcombine.high %v285, %v285
        %v300 = vsel %vm290, %v284, 0.0
        %v301 = vsel %vm291, %v296, 0.0
        %v302 = vsel %vm292, %v285, 0.0
        %v303 = vsel %vm293, %v297, 0.0
        %v308 = vcombine.low %v300, %v301
        %v309 = vcombine.low %v302, %v303
        %v312 = vsub.f32 %v284, %v308
        %v313 = vsub.f32 %v285, %v309
        %v314 = vld [vmem:[%s249] sm:$0xf]
        %vm315 = vcmask 1043456
        %v316 = vsel %vm315, %v300, 0.0
        %v317 = vsel %vm315, %v301, 0.0
        %v318 = vadd.f32 %v316, %v317
        %v319 = vsel %vm315, %v302, 0.0
        %v320 = vadd.f32 %v318, %v319
        %v321 = vsel %vm315, %v303, 0.0
        %v322 = vadd.f32 %v320, %v321
        %323 = vadd.xlane.f32.xlu0 %v322
        %v324 = vpop.xlane.xlu0 %323
        %v325 = vadd.f32 %v324, 0.0
        %v326 = vadd.f32 %v314, %v325
        %vm327 = vcmask 3072
        %328 = vst.msk [vmem:[%s249] sm:$0xf] %vm327, %v326
        %v329 = vld [vmem:[%s253] sm:$0xf]
        %v330 = vmul.f32 %v300, %v300
        %v331 = vmul.f32 %v301, %v301
        %v332 = vmul.f32 %v302, %v302
        %v333 = vmul.f32 %v303, %v303
        %v334 = vsel %vm315, %v330, 0.0
        %v335 = vsel %vm315, %v331, 0.0
        %v336 = vadd.f32 %v334, %v335
        %v337 = vsel %vm315, %v332, 0.0
        %v338 = vadd.f32 %v336, %v337
        %v339 = vsel %vm315, %v333, 0.0
        %v340 = vadd.f32 %v338, %v339
        %341 = vadd.xlane.f32.xlu0 %v340
        %v342 = vpop.xlane.xlu0 %341
        %v343 = vadd.f32 %v342, 0.0
        %v344 = vadd.f32 %v329, %v343
        %345 = vst.msk [vmem:[%s253] sm:$0xf] %vm327, %v344
        %v346 = vld [vmem:[%s257] sm:$0xf]
        %v349 = vcombine.high %v312, %v312
        %v350 = vcombine.high %v313, %v313
        %v353 = vsel %vm315, %v312, 0.0
        %v354 = vsel %vm315, %v349, 0.0
        %v355 = vadd.f32 %v353, %v354
        %v356 = vsel %vm315, %v313, 0.0
        %v357 = vadd.f32 %v355, %v356
        %v358 = vsel %vm315, %v350, 0.0
        %v359 = vadd.f32 %v357, %v358
        %360 = vadd.xlane.f32.xlu0 %v359
        %v361 = vpop.xlane.xlu0 %360
        %v362 = vadd.f32 %v361, 0.0
        %v363 = vadd.f32 %v346, %v362
        %364 = vst.msk [vmem:[%s257] sm:$0xf] %vm327, %v363
        %v365 = vld [vmem:[%s261] sm:$0xf]
        %v366 = vmul.f32 %v312, %v312
        %v367 = vmul.f32 %v313, %v313
        %v370 = vcombine.high %v366, %v366
        %v371 = vcombine.high %v367, %v367
        %v374 = vsel %vm315, %v366, 0.0
        %v375 = vsel %vm315, %v370, 0.0
        %v376 = vadd.f32 %v374, %v375
        %v377 = vsel %vm315, %v367, 0.0
        %v378 = vadd.f32 %v376, %v377
        %v379 = vsel %vm315, %v371, 0.0
        %v380 = vadd.f32 %v378, %v379
        %381 = vadd.xlane.f32.xlu0 %v380
        %v382 = vpop.xlane.xlu0 %381
        %v383 = vadd.f32 %v382, 0.0
        %v384 = vadd.f32 %v365, %v383
        %385 = vst.msk [vmem:[%s261] sm:$0xf] %vm327, %v384
        %p386 = scmp.lt.s32.totalorder %s23, 1
        %s387 = scalar_select %p386, %s23, 1
        %s388 = smul.addr %s387, 4
        %s389 = scalar_lea.vmem %s1, %s388
        %p390 = scmp.lt.s32.totalorder %s23, 1
        %s391 = scalar_select %p390, %s23, 1
        %s392 = smul.addr %s391, 4
        %s393 = scalar_lea.vmem %s2, %s392
        %p394 = scmp.lt.s32.totalorder %s23, 1
        %s395 = scalar_select %p394, %s23, 1
        %s396 = smul.addr %s395, 4
        %s397 = scalar_lea.vmem %s3, %s396
        %p398 = scmp.lt.s32.totalorder %s23, 1
        %s399 = scalar_select %p398, %s23, 1
        %s400 = smul.addr %s399, 4
        %s401 = scalar_lea.vmem %s4, %s400
        // Predicated region
        $region33: #{tpu_custom_call.1} parent=23 // pred_check
          %p402 = pneg %p77
        $region34: #{tpu_custom_call.1} parent=23 // pred_check_branch
          %404 = sbr.rel (%p402) target = $region36
        $region35: #{tpu_custom_call.1} parent=23 // pred_region
          _
        $region36: #{tpu_custom_call.1} parent=23 // pred_fallthru
          _
        // Predicated region
        $region37: #{tpu_custom_call.1} parent=23 // pred_check
          %p405 = pneg %p103
        $region38: #{tpu_custom_call.1} parent=23 // pred_check_branch
          %407 = sbr.rel (%p405) target = $region40
        $region39: #{tpu_custom_call.1} parent=23 // pred_region
          _
        $region40: #{tpu_custom_call.1} parent=23 // pred_fallthru
          _
        // Predicated region
        $region41: #{tpu_custom_call.1} parent=23 // pred_check
          %p408 = pneg %p129
        $region42: #{tpu_custom_call.1} parent=23 // pred_check_branch
          %410 = sbr.rel (%p408) target = $region44
        $region43: #{tpu_custom_call.1} parent=23 // pred_region
          _
        $region44: #{tpu_custom_call.1} parent=23 // pred_fallthru
          _
        // Predicated region
        $region45: #{tpu_custom_call.1} parent=23 // pred_check
          %p411 = pneg %p155
        $region46: #{tpu_custom_call.1} parent=23 // pred_check_branch
          %413 = sbr.rel (%p411) target = $region48
        $region47: #{tpu_custom_call.1} parent=23 // pred_region
          _
        $region48: #{tpu_custom_call.1} parent=23 // pred_fallthru
          _
      $region24: #{tpu_custom_call.1} parent=5 // pred_fallthru
        _
      %p414 = scmp.le.s32.totalorder 2, %s14
      // Predicated region
      $region49: #{tpu_custom_call.1} parent=5 // pred_check
        %p415 = pneg %p414
      $region50: #{tpu_custom_call.1} parent=5 // pred_check_branch
        %417 = sbr.rel (%p415) target = $region52
      $region51: #{tpu_custom_call.1} parent=5 // pred_region
        %s418 = ssub.s32 %s14, 2
        // Predicated region
        $region53: #{tpu_custom_call.1} parent=51 // pred_check
          %p419 = pneg %p83
        $region54: #{tpu_custom_call.1} parent=51 // pred_check_branch
          %421 = sbr.rel (%p419) target = $region56
        $region55: #{tpu_custom_call.1} parent=51 // pred_region
          %p422 = scmp.lt.s32.totalorder %s25, 1
          %s423 = scalar_select %p422, %s25, 1
          %s424 = smul.addr %s423, 4
          %s425 = scalar_lea.vmem %s1, %s424
        $region56: #{tpu_custom_call.1} parent=51 // pred_fallthru
          _
        // Predicated region
        $region57: #{tpu_custom_call.1} parent=51 // pred_check
          %p426 = pneg %p109
        $region58: #{tpu_custom_call.1} parent=51 // pred_check_branch
          %428 = sbr.rel (%p426) target = $region60
        $region59: #{tpu_custom_call.1} parent=51 // pred_region
          %p429 = scmp.lt.s32.totalorder %s25, 1
          %s430 = scalar_select %p429, %s25, 1
          %s431 = smul.addr %s430, 4
          %s432 = scalar_lea.vmem %s2, %s431
        $region60: #{tpu_custom_call.1} parent=51 // pred_fallthru
          _
        // Predicated region
        $region61: #{tpu_custom_call.1} parent=51 // pred_check
          %p433 = pneg %p135
        $region62: #{tpu_custom_call.1} parent=51 // pred_check_branch
          %435 = sbr.rel (%p433) target = $region64
        $region63: #{tpu_custom_call.1} parent=51 // pred_region
          %p436 = scmp.lt.s32.totalorder %s25, 1
          %s437 = scalar_select %p436, %s25, 1
          %s438 = smul.addr %s437, 4
          %s439 = scalar_lea.vmem %s3, %s438
        $region64: #{tpu_custom_call.1} parent=51 // pred_fallthru
          _
        // Predicated region
        $region65: #{tpu_custom_call.1} parent=51 // pred_check
          %p440 = pneg %p161
        $region66: #{tpu_custom_call.1} parent=51 // pred_check_branch
          %442 = sbr.rel (%p440) target = $region68
        $region67: #{tpu_custom_call.1} parent=51 // pred_region
          %p443 = scmp.lt.s32.totalorder %s25, 1
          %s444 = scalar_select %p443, %s25, 1
          %s445 = smul.addr %s444, 4
          %s446 = scalar_lea.vmem %s4, %s445
        $region68: #{tpu_custom_call.1} parent=51 // pred_fallthru
          _
      $region52: #{tpu_custom_call.1} parent=5 // pred_fallthru
        _
    $region6: #{tpu_custom_call.1} parent=1 // loop_footer
      %s18 = sadd.s32 1, %s14
    $region7: #{tpu_custom_call.1} parent=1 // loop_footer_branch
      %13 = sbr.rel target = $region3
    $region8: #{tpu_custom_call.1} parent=1 // loop_exit
      _
    %447 = vsyncpa [#allocation3], 1
    %s448 = scalar_lea.sflag [#allocation3], 1
    %449 = vsyncpa %s448, 1

</llo_original>
